<compile_context>
chip_gen: v7x
topology: tpu7x:2x2x1
jax: 0.10.0
libtpu: 0.0.40
codegen_flags: <defaults>
</compile_context>

<pallas_src>
import functools

import jax
import jax.numpy as jnp
from jax import lax
from jax.experimental import pallas as pl
from jax.experimental.pallas import tpu as pltpu

_MiB = 1024 * 1024


# --------------------------- hardware queries --------------------------------


def _device_kind():
    try:
        return jax.devices()[0].device_kind.lower()
    except Exception:
        return ""


def _tpu_vmem_bytes():
    """Per-core VMEM capacity, generation aware, with safe fallbacks."""
    try:
        info = pltpu.get_tpu_info()
        cap = getattr(info, "vmem_capacity_bytes", None)
        if cap:
            return int(cap)
    except Exception:
        pass
    kind = _device_kind()
    if "v7" in kind or "tpu7" in kind:
        return 64 * _MiB                       # v7x: 64 MiB / TensorCore
    if any(t in kind for t in ("v4", "v5", "v6")):
        return 128 * _MiB                      # v4 / v5e / v5p / v6e
    return 64 * _MiB                           # unknown: be conservative


def _has_bf16_eup():
    """bf16 transcendentals are native on v6e / v7x (not on v5e and older)."""
    kind = _device_kind()
    return any(t in kind for t in ("v6", "v7", "tpu7"))


# --------------------------- tiling helper ------------------------------------


def _fit_tile(L, per_row_bytes, budget_bytes, sublane):
    """Largest L tile that (a) is a multiple of `sublane`, (b) divides L and
    (c) keeps TL * per_row_bytes <= budget_bytes.  Falls back to a single
    full-L block when L is not a multiple of the sublane packing."""
    if L % sublane != 0:
        return L
    cap = budget_bytes // max(per_row_bytes, 1)
    cap = max(sublane, min(L, (cap // sublane) * sublane))
    tl = cap
    while L % tl:
        tl -= sublane
    return max(tl, sublane)


# ----------------------------- kernels ----------------------------------------


def _make_inter_word_kernel(*, tl, has_mask, mask_full_l, return_attn,
                            bf16_exp, mxu_bf16):
    """softmax(Q K^T) (+mask) @ V per (batch, head, L-tile).

    Ref blocks: Q (TL,D), K (S,D), V (S,M), mask (TL|L|1, S|1),
    outputs O (TL,M) and optionally A (TL,S)."""

    def kernel(*refs):
        if has_mask:
            q_ref, k_ref, v_ref, m_ref = refs[:4]
            rest = refs[4:]
        else:
            q_ref, k_ref, v_ref = refs[:3]
            rest = refs[3:]
        if return_attn:
            o_ref, a_ref = rest
        else:
            (o_ref,) = rest

        q = q_ref[...]
        k = k_ref[...]
        v = v_ref[...]
        if mxu_bf16 and q.dtype == jnp.float32:
            q = q.astype(jnp.bfloat16)
            k = k.astype(jnp.bfloat16)

        # Q K^T (contract d with d) -> (TL, S), f32 accumulation on the MXU.
        qk = lax.dot_general(q, k, (((1,), (1,)), ((), ())),
                             preferred_element_type=jnp.float32)
        mx = jnp.max(qk, axis=-1, keepdims=True)
        x = qk - mx
        if bf16_exp:
            # bf16 EUP (v6e/v7x) ~doubles exp throughput; f32 row-sum.
            e = jnp.exp(x.astype(jnp.bfloat16))
            denom = jnp.sum(e, axis=-1, keepdims=True, dtype=jnp.float32)
        else:
            e = jnp.exp(x)
            denom = jnp.sum(e, axis=-1, keepdims=True)
        # Exact reciprocal on the (TL,1) denominator (cheap) so A rows sum to 1
        # like torch.softmax (pl.reciprocal(approx=True) was flagged).
        a = e * (1.0 / denom)                                  # f32 (TL, S)

        if has_mask:
            if mask_full_l:
                # Resident full-(L,S) mask block; slice this tile's rows.
                start = pl.multiple_of(pl.program_id(2) * tl, tl)
                mblk = m_ref[pl.ds(start, tl), :]
            else:
                mblk = m_ref[...]
            # Mask is added AFTER softmax (matches the PyTorch reference) and
            # the masked A feeds the A @ V matmul.
            a = a + jnp.broadcast_to(mblk.astype(jnp.float32), a.shape)

        if return_attn:
            a_ref[...] = a.astype(a_ref.dtype)

        av_dtype = (jnp.bfloat16 if (mxu_bf16 and v.dtype == jnp.float32)
                    else v.dtype)
        o_ref[...] = jnp.dot(a.astype(av_dtype), v.astype(av_dtype),
                             preferred_element_type=jnp.float32
                             ).astype(o_ref.dtype)

    return kernel


def _make_inter_hidden_kernel(*, mxu_bf16):
    """Q @ softmax_d(V^T K)^T per (batch, head), L tiled.

    softmax(V^T K) is computed once per (n, h) at l == 0 into a VMEM scratch
    (L axis is "arbitrary" so the scratch persists across L tiles)."""

    def kernel(q_ref, k_ref, v_ref, o_ref, kv_scr):
        @pl.when(pl.program_id(2) == 0)
        def _():
            v_ = v_ref[...]
            k_ = k_ref[...]
            if mxu_bf16 and v_.dtype == jnp.float32:
                v_ = v_.astype(jnp.bfloat16)
                k_ = k_.astype(jnp.bfloat16)
            # KV[m, d] = sum_s V[s, m] K[s, d]  -> (M, D)
            kv = lax.dot_general(v_, k_, (((0,), (0,)), ((), ())),
                                 preferred_element_type=jnp.float32)
            mx = jnp.max(kv, axis=-1, keepdims=True)
            e = jnp.exp(kv - mx)
            a = e * (1.0 / jnp.sum(e, axis=-1, keepdims=True))
            kv_scr[...] = a.astype(kv_scr.dtype)

        q_ = q_ref[...].astype(kv_scr.dtype)
        # O[l, m] = sum_d Q[l, d] A[m, d]  -> (TL2, M)
        o_ref[...] = lax.dot_general(q_, kv_scr[...], (((1,), (1,)), ((), ())),
                                     preferred_element_type=jnp.float32
                                     ).astype(o_ref.dtype)

    return kernel


# ----------------------------- wrapper -----------------------------------------


@functools.partial(jax.jit,
                   static_argnames=("attn_type", "return_attn",
                                    "mxu_bf16", "bf16_exp"))
def linear_softmax_attention(queries, keys, values, attention_mask=None,
                             attn_type="inter-word", return_attn=True,
                             mxu_bf16=False, bf16_exp=None):
    """Pallas implementation of LinearSoftmaxAttention.forward.

    queries: [N, L, H, D], keys: [N, S, H, D], values: [N, S, H, M]
    attention_mask (inter-word only): broadcastable to [N, H, L, S].
    Returns (V, A) like the PyTorch module (A is None for inter-hidden, or when
    return_attn=False).  mxu_bf16 / bf16_exp are opt-in speed knobs.
    """
    N, L, H, D = queries.shape
    S = keys.shape[1]
    M = values.shape[3]

    itemsize = jnp.dtype(queries.dtype).itemsize
    sublane = max(8, 32 // max(itemsize, 1))        # 8 f32 / 16 bf16 / 32 int8

    vmem_bytes = _tpu_vmem_bytes()
    big_vmem = vmem_bytes >= 96 * _MiB
    family_budget = (44 if big_vmem else 15) * _MiB     # (TL,S)-scaled buffers
    resident_budget = (24 if big_vmem else 8) * _MiB    # resident full-L mask
    vmem_limit = (96 if big_vmem else 40) * _MiB

    if bf16_exp is None:
        # Auto: only when inputs are already bf16 (keeps f32 parity with torch);
        # force bf16_exp=True to also use it for f32 inputs on v6e/v7x.
        bf16_exp = (queries.dtype == jnp.bfloat16) and _has_bf16_eup()
    bf16_exp = bool(bf16_exp) and _has_bf16_eup()        # no bf16 EUP on v5e

    # heads-major for per-(batch, head) 2-D tiles.
    q = jnp.transpose(queries, (0, 2, 1, 3))    # (N, H, L, D)
    k = jnp.transpose(keys, (0, 2, 1, 3))       # (N, H, S, D)
    v = jnp.transpose(values, (0, 2, 1, 3))     # (N, H, S, M)

    if attn_type == "inter-word":
        has_mask = attention_mask is not None
        mask = None
        mask_full_l = False
        mN = mH = mL = mS = 1
        budget = family_budget
        if has_mask:
            # Pre-cast to the output dtype (halves mask HBM bytes for bf16).
            mask = jnp.asarray(attention_mask).astype(queries.dtype)
            mask = jnp.reshape(mask, (1,) * (4 - mask.ndim) + mask.shape)
            mN, mH, mL, mS = mask.shape          # each is 1 or the full extent
            resident_bytes = 2 * mL * mS * itemsize
            mask_full_l = (mL == L) and (resident_bytes <= resident_budget)
            if mask_full_l:
                budget = max(family_budget - resident_bytes, family_budget // 4)

        mask_row_bytes = 0
        if has_mask and (not mask_full_l) and mL == L:
            mask_row_bytes = 2 * mS * itemsize   # double-buffered tiled mask

        per_row = (4 * 4 * S                          # qk/e/a/broadcast f32 temps
                   + 2 * (D + M) * itemsize           # Q / O double buffers
                   + (2 * S * itemsize if return_attn else 0)   # A out tile
                   + mask_row_bytes)
        TL = _fit_tile(L, per_row, budget, sublane)
        n_l_tiles = L // TL
        if n_l_tiles == 1:
            mask_full_l = False                  # single tile: tiled == resident

        grid = (N, H, n_l_tiles)

        q_spec = pl.BlockSpec((None, None, TL, D), lambda n, h, l: (n, h, l, 0))
        # K / V index_maps ignore l -> blocks stay resident across L tiles.
        k_spec = pl.BlockSpec((None, None, S, D), lambda n, h, l: (n, h, 0, 0))
        v_spec = pl.BlockSpec((None, None, S, M), lambda n, h, l: (n, h, 0, 0))
        o_spec = pl.BlockSpec((None, None, TL, M), lambda n, h, l: (n, h, l, 0))
        a_spec = pl.BlockSpec((None, None, TL, S), lambda n, h, l: (n, h, l, 0))
        # Note: if profiling on v5e shows the A writeback DMA exposed, deepen it
        # with pipeline_mode=pl.Buffered(3) on a_spec.

        in_specs = [q_spec, k_spec, v_spec]
        args = (q, k, v)
        if has_mask:
            if mask_full_l:
                m_block = (None, None, mL, mS)   # full-L resident mask block

                def m_index(n, h, l, _N=mN, _H=mH):
                    return (n if _N == N else 0, h if _H == H else 0, 0, 0)
            else:
                bL = TL if mL == L else 1
                m_block = (None, None, bL, mS)

                def m_index(n, h, l, _N=mN, _H=mH, _L=mL):
                    return (n if _N == N else 0, h if _H == H else 0,
                            l if _L == L else 0, 0)
            in_specs.append(pl.BlockSpec(m_block, m_index))
            args = args + (mask,)

        if return_attn:
            out_shape = (jax.ShapeDtypeStruct((N, H, L, M), queries.dtype),   # V
                         jax.ShapeDtypeStruct((N, H, L, S), queries.dtype))   # A
            out_specs = (o_spec, a_spec)
        else:
            out_shape = jax.ShapeDtypeStruct((N, H, L, M), queries.dtype)
            out_specs = o_spec

        kernel = _make_inter_word_kernel(
            tl=TL, has_mask=has_mask, mask_full_l=mask_full_l,
            return_attn=return_attn, bf16_exp=bf16_exp, mxu_bf16=mxu_bf16)

        res = pl.pallas_call(
            kernel,
            out_shape=out_shape,
            grid=grid,
            in_specs=in_specs,
            out_specs=out_specs,
            compiler_params=pltpu.CompilerParams(
                dimension_semantics=("parallel", "parallel", "parallel"),
                vmem_limit_bytes=vmem_limit),
        )(*args)

        if return_attn:
            o, a = res
            return jnp.transpose(o, (0, 2, 1, 3)), a   # V: [N,L,H,M], A: [N,H,L,S]
        return jnp.transpose(res, (0, 2, 1, 3)), None

    elif attn_type == "inter-hidden":
        # Only (TL2, D) Q and (TL2, M) O double buffers scale with the L tile;
        # K/V stay resident and softmax(V^T K) is computed once per (n, h).
        per_row = 4 * (D + M) * itemsize
        TL2 = _fit_tile(L, per_row, (32 if big_vmem else 12) * _MiB, sublane)
        scr_dtype = (jnp.bfloat16 if (mxu_bf16 and queries.dtype == jnp.float32)
                     else queries.dtype)

        o = pl.pallas_call(
            _make_inter_hidden_kernel(mxu_bf16=mxu_bf16),
            out_shape=jax.ShapeDtypeStruct((N, H, L, M), queries.dtype),
            grid=(N, H, L // TL2),
            in_specs=[
                pl.BlockSpec((None, None, TL2, D), lambda n, h, l: (n, h, l, 0)),
                pl.BlockSpec((None, None, S, D), lambda n, h, l: (n, h, 0, 0)),
                pl.BlockSpec((None, None, S, M), lambda n, h, l: (n, h, 0, 0))],
            out_specs=pl.BlockSpec((None, None, TL2, M),
                                   lambda n, h, l: (n, h, l, 0)),
            scratch_shapes=[pltpu.VMEM((M, D), scr_dtype)],
            compiler_params=pltpu.CompilerParams(
                dimension_semantics=("parallel", "parallel", "arbitrary"),
                vmem_limit_bytes=vmem_limit),
        )(q, k, v)
        return jnp.transpose(o, (0, 2, 1, 3)), None     # V: [N, L, H, M]

    else:
        raise ValueError("Unknown attn type")


# ----------------------------- reference + demo --------------------------------


def _ref_inter_word(queries, keys, values, mask=None):
    qk = jnp.einsum("nqhd,nkhd->nhqk", queries, keys)
    a = jax.nn.softmax(qk, axis=-1)
    if mask is not None:
        a = a + mask
    v = jnp.einsum("nhqs,nshd->nqhd", a, values)
    return v, a


def _ref_inter_hidden(queries, keys, values):
    kv = jnp.einsum("nshd,nshm->nhmd", keys, values)
    a = jax.nn.softmax(kv, axis=-1)
    v = jnp.einsum("nlhd,nhmd->nlhm", queries, a)
    return v, None


if __name__ == "__main__":
    key = jax.random.PRNGKey(0)
    kq, kk, kv, km = jax.random.split(key, 4)

    N, L, S, H, D = 2, 8, 8, 4, 32
    queries = jax.random.normal(kq, (N, L, H, D), dtype=jnp.float32)
    keys    = jax.random.normal(kk, (N, S, H, D), dtype=jnp.float32)
    values  = jax.random.normal(kv, (N, S, H, D), dtype=jnp.float32)

    TOL = dict(atol=5e-4, rtol=5e-4)

    # inter-word (default), no mask
    v_iw, a_iw = linear_softmax_attention(queries, keys, values,
                                          attn_type="inter-word")
    jax.block_until_ready((v_iw, a_iw))
    v_ref, a_ref = _ref_inter_word(queries, keys, values)
    assert jnp.allclose(v_iw, v_ref, **TOL)
    assert jnp.allclose(a_iw, a_ref, **TOL)

    # inter-word with a broadcastable (N, 1, L, S) mask (added after softmax)
    mask = 0.1 * jax.random.uniform(km, (N, 1, L, S), dtype=jnp.float32)
    v_m, a_m = linear_softmax_attention(queries, keys, values,
                                        attention_mask=mask,
                                        attn_type="inter-word")
    jax.block_until_ready((v_m, a_m))
    v_mref, a_mref = _ref_inter_word(queries, keys, values, mask)
    assert jnp.allclose(v_m, v_mref, **TOL)
    assert jnp.allclose(a_m, a_mref, **TOL)

    # inter-word, A output dropped (big HBM saving when A is unused)
    v_nr, a_nr = linear_softmax_attention(queries, keys, values,
                                          attn_type="inter-word",
                                          return_attn=False)
    jax.block_until_ready(v_nr)
    assert a_nr is None
    assert jnp.allclose(v_nr, v_ref, **TOL)

    # inter-hidden
    v_ih, a_ih = linear_softmax_attention(queries, keys, values,
                                          attn_type="inter-hidden")
    jax.block_until_ready(v_ih)
    v_ref2, _ = _ref_inter_hidden(queries, keys, values)
    assert a_ih is None
    assert jnp.allclose(v_ih, v_ref2, **TOL)

    # bf16 inputs (exercises bf16 exp on v6e/v7x, bf16 MXU operands natively)
    q16 = queries.astype(jnp.bfloat16)
    k16 = keys.astype(jnp.bfloat16)
    v16 = values.astype(jnp.bfloat16)
    v_b, a_b = linear_softmax_attention(q16, k16, v16, attn_type="inter-word")
    jax.block_until_ready((v_b, a_b))
    v_bref, a_bref = _ref_inter_word(q16.astype(jnp.float32),
                                     k16.astype(jnp.float32),
                                     v16.astype(jnp.float32))
    assert jnp.allclose(v_b.astype(jnp.float32), v_bref, atol=5e-2, rtol=5e-2)
    assert jnp.allclose(a_b.astype(jnp.float32), a_bref, atol=5e-2, rtol=5e-2)

    # opt-in bf16 MXU operands for f32 inputs (sanity check, loose tolerance)
    v_fast, _ = linear_softmax_attention(queries, keys, values,
                                         attn_type="inter-word",
                                         return_attn=False, mxu_bf16=True)
    jax.block_until_ready(v_fast)
    assert bool(jnp.all(jnp.isfinite(v_fast)))
    assert jnp.allclose(v_fast, v_ref, atol=0.25, rtol=0.25)

    print("KERNEL_OK")
</pallas_src>

<mosaic_0001>
module attributes {stable_mosaic.version = 11 : i64} {
  func.func @kernel(%arg0: i32, %arg1: i32, %arg2: i32, %arg3: memref<1x1x8x32xf32, #tpu.memory_space<vmem>>, %arg4: memref<1x1x8x32xf32, #tpu.memory_space<vmem>>, %arg5: memref<1x1x8x32xf32, #tpu.memory_space<vmem>>, %arg6: memref<1x1x8x32xf32, #tpu.memory_space<vmem>>, %arg7: memref<1x1x8x8xf32, #tpu.memory_space<vmem>>) attributes {dimension_semantics = [#tpu.dimension_semantics<parallel>, #tpu.dimension_semantics<parallel>, #tpu.dimension_semantics<parallel>], iteration_bounds = array<i64: 2, 4, 1>, scalar_prefetch = 0 : i64, scratch_operands = 0 : i64, tpu.core_type = #tpu.core_type<tc>, window_params = [{transform_indices = @transform_0, window_bounds = array<i64: 1, 1, 8, 32>}, {transform_indices = @transform_1, window_bounds = array<i64: 1, 1, 8, 32>}, {transform_indices = @transform_2, window_bounds = array<i64: 1, 1, 8, 32>}, {transform_indices = @transform_3, window_bounds = array<i64: 1, 1, 8, 32>}, {transform_indices = @transform_4, window_bounds = array<i64: 1, 1, 8, 8>}]} {
    %c0 = arith.constant 0 : index
    %c0_0 = arith.constant 0 : index
    %c0_1 = arith.constant 0 : index
    %c0_2 = arith.constant 0 : index
    %0 = vector.load %arg3[%c0, %c0_0, %c0_1, %c0_2] : memref<1x1x8x32xf32, #tpu.memory_space<vmem>>, vector<1x1x8x32xf32>
    %1 = vector.shape_cast %0 : vector<1x1x8x32xf32> to vector<8x32xf32>
    %c0_3 = arith.constant 0 : index
    %c0_4 = arith.constant 0 : index
    %c0_5 = arith.constant 0 : index
    %c0_6 = arith.constant 0 : index
    %2 = vector.load %arg4[%c0_3, %c0_4, %c0_5, %c0_6] : memref<1x1x8x32xf32, #tpu.memory_space<vmem>>, vector<1x1x8x32xf32>
    %3 = vector.shape_cast %2 : vector<1x1x8x32xf32> to vector<8x32xf32>
    %c0_7 = arith.constant 0 : index
    %c0_8 = arith.constant 0 : index
    %c0_9 = arith.constant 0 : index
    %c0_10 = arith.constant 0 : index
    %4 = vector.load %arg5[%c0_7, %c0_8, %c0_9, %c0_10] : memref<1x1x8x32xf32, #tpu.memory_space<vmem>>, vector<1x1x8x32xf32>
    %5 = vector.shape_cast %4 : vector<1x1x8x32xf32> to vector<8x32xf32>
    %cst = arith.constant dense<0.000000e+00> : vector<8x8xf32>
    %6 = tpu.matmul %1, %3, %cst {dimension_numbers = #tpu.dot_dimension_numbers<[1], [1], [0], [0], [0, 0, 1, 0], [], []>} : vector<8x32xf32>, vector<8x32xf32>, vector<8x8xf32> -> vector<8x8xf32>
    %cst_11 = arith.constant dense<0xFF800000> : vector<8xf32>
    %7 = vector.multi_reduction <maximumf>, %6, %cst_11 [1] : vector<8x8xf32> to vector<8xf32>
    %8 = vector.shape_cast %7 : vector<8xf32> to vector<8x1xf32>
    %9 = vector.broadcast %8 : vector<8x1xf32> to vector<8x8xf32>
    %10 = arith.subf %6, %9 : vector<8x8xf32>
    %11 = math.exp %10 : vector<8x8xf32>
    %cst_12 = arith.constant dense<0.000000e+00> : vector<8xf32>
    %12 = vector.multi_reduction <add>, %11, %cst_12 [1] : vector<8x8xf32> to vector<8xf32>
    %13 = vector.shape_cast %12 : vector<8xf32> to vector<8x1xf32>
    %cst_13 = arith.constant 1.000000e+00 : f32
    %14 = vector.broadcast %cst_13 : f32 to vector<8x1xf32>
    %15 = arith.divf %14, %13 : vector<8x1xf32>
    %16 = vector.broadcast %15 : vector<8x1xf32> to vector<8x8xf32>
    %17 = arith.mulf %11, %16 : vector<8x8xf32>
    %c0_14 = arith.constant 0 : index
    %c0_15 = arith.constant 0 : index
    %c0_16 = arith.constant 0 : index
    %c0_17 = arith.constant 0 : index
    %18 = vector.load %arg7[%c0_14, %c0_15, %c0_16, %c0_17] : memref<1x1x8x8xf32, #tpu.memory_space<vmem>>, vector<1x1x8x8xf32>
    %19 = vector.shape_cast %18 : vector<1x1x8x8xf32> to vector<8x8xf32>
    %20 = vector.shape_cast %17 : vector<8x8xf32> to vector<1x1x8x8xf32>
    tpu.vector_store %arg7[%c0_14, %c0_15, %c0_16, %c0_17], %20 {strides = array<i32>} : memref<1x1x8x8xf32, #tpu.memory_space<vmem>>, vector<1x1x8x8xf32>,
    %cst_18 = arith.constant dense<0.000000e+00> : vector<8x32xf32>
    %21 = tpu.matmul %17, %5, %cst_18 {dimension_numbers = #tpu.dot_dimension_numbers<[1], [0], [0], [1], [0, 0, 1, 1], [], []>} : vector<8x8xf32>, vector<8x32xf32>, vector<8x32xf32> -> vector<8x32xf32>
    %c0_19 = arith.constant 0 : index
    %c0_20 = arith.constant 0 : index
    %c0_21 = arith.constant 0 : index
    %c0_22 = arith.constant 0 : index
    %22 = vector.load %arg6[%c0_19, %c0_20, %c0_21, %c0_22] : memref<1x1x8x32xf32, #tpu.memory_space<vmem>>, vector<1x1x8x32xf32>
    %23 = vector.shape_cast %22 : vector<1x1x8x32xf32> to vector<8x32xf32>
    %24 = vector.shape_cast %21 : vector<8x32xf32> to vector<1x1x8x32xf32>
    tpu.vector_store %arg6[%c0_19, %c0_20, %c0_21, %c0_22], %24 {strides = array<i32>} : memref<1x1x8x32xf32, #tpu.memory_space<vmem>>, vector<1x1x8x32xf32>,
    return
  }
  func.func @transform_0(%arg0: i32, %arg1: i32, %arg2: i32) -> (i32, i32, i32, i32) {
    %c0_i32 = arith.constant 0 : i32
    %c0_i32_0 = arith.constant 0 : i32
    return %arg0, %arg1, %arg2, %c0_i32 : i32, i32, i32, i32
  }
  func.func @transform_1(%arg0: i32, %arg1: i32, %arg2: i32) -> (i32, i32, i32, i32) {
    %c0_i32 = arith.constant 0 : i32
    %c0_i32_0 = arith.constant 0 : i32
    %c0_i32_1 = arith.constant 0 : i32
    return %arg0, %arg1, %c0_i32, %c0_i32_0 : i32, i32, i32, i32
  }
  func.func @transform_2(%arg0: i32, %arg1: i32, %arg2: i32) -> (i32, i32, i32, i32) {
    %c0_i32 = arith.constant 0 : i32
    %c0_i32_0 = arith.constant 0 : i32
    %c0_i32_1 = arith.constant 0 : i32
    return %arg0, %arg1, %c0_i32, %c0_i32_0 : i32, i32, i32, i32
  }
  func.func @transform_3(%arg0: i32, %arg1: i32, %arg2: i32) -> (i32, i32, i32, i32) {
    %c0_i32 = arith.constant 0 : i32
    %c0_i32_0 = arith.constant 0 : i32
    return %arg0, %arg1, %arg2, %c0_i32 : i32, i32, i32, i32
  }
  func.func @transform_4(%arg0: i32, %arg1: i32, %arg2: i32) -> (i32, i32, i32, i32) {
    %c0_i32 = arith.constant 0 : i32
    %c0_i32_0 = arith.constant 0 : i32
    return %arg0, %arg1, %arg2, %c0_i32 : i32, i32, i32, i32
  }
}

</mosaic_0001>

<llo_original>
// kernel: linear_softmax_attention.1
$region0: #{linear_softmax_attention.1}
  #allocation0 [shape = 'u32[]', space=smem, size = 0x4, offset = 0x4, fixed_abs, tag = 'smem constant byte address 0x4 - core index']
  #allocation1 [shape = 'u32[144,128]{1,0:T(1,128)}', space=vmem, size = 0x12000, scoped, tag = 'internal scratch']
  %s0 = inlined_call_operand.vmem [shape: f32[2,4,8,32], index: 0, kind: input, shape index: {}]
  %s1 = inlined_call_operand.vmem [shape: f32[2,4,8,32], index: 1, kind: input, shape index: {}]
  %s2 = inlined_call_operand.vmem [shape: f32[2,4,8,32], index: 2, kind: input, shape index: {}]
  %s3 = inlined_call_operand.vmem [shape: f32[2,4,8,32], index: 3, kind: output, shape index: {0}]
  %s4 = inlined_call_operand.hbm [shape: f32[2,4,8,8], index: 4, kind: output, shape index: {1}]
  %5 = xla_tuple %s3, %s4
  %s6 = sld [smem:[#allocation0]]
  $region53: #{linear_softmax_attention.1} parent=0
    _
  %s8 = ssub.s32 1, %s6
  %s9 = scalar_select 0, %s8, %s6
  $region1: #{linear_softmax_attention.1} parent=0
    #allocation2 [shape = 'u8[8192]{0}', space=vmem, size = 0x2000, scoped, tag = 'output window, operand 1']
    #allocation3 [shape = 's32[2]{0}', space=sflag, size = 0x8, scoped, tag = 'scoped memory for linear_softmax_attention.1']
    %10 = vsyncpa [#allocation3], 0
    %s11 = scalar_lea.sflag [#allocation3], 1
    %12 = vsyncpa %s11, 0
    loop: start=0, step=1, limit=10
    $region2: #{linear_softmax_attention.1} parent=1 // loop_pre_header
      _
    $region3: #{linear_softmax_attention.1} parent=1 // loop_header
      %s14 = sphi 0, %s18
      %p15 = scmp.ge.s32.totalorder %s14, 10
      %s21 = sphi 0, %s40
      %s22 = sphi 0, %s36
      %s23 = sphi 0, %s32
      %s24 = sphi 0, %s21
      %s25 = sphi 0, %s22
      %s26 = sphi 0, %s23
      %s27 = sphi 0, %s24
      %s28 = sphi 0, %s25
      %s29 = sphi 0, %s26
      %s47 = sphi 0, %s49
      %s50 = sphi 0, %s47
      %s51 = sphi 0, %s50
      %s67 = sphi 0, %s51
      %s75 = sphi 0, %s77
      %s78 = sphi 0, %s75
      %s79 = sphi 0, %s78
      %s95 = sphi 0, %s79
      %s103 = sphi 0, %s105
      %s106 = sphi 0, %s103
      %s107 = sphi 0, %s106
      %s123 = sphi 0, %s107
      %s133 = sphi 0, %s135
      %s136 = sphi 0, %s133
      %s137 = sphi 0, %s136
      %s153 = sphi 0, %s137
      %s163 = sphi 0, %s165
      %s166 = sphi 0, %s163
      %s167 = sphi 0, %s166
      %s183 = sphi 0, %s167
    $region4: #{linear_softmax_attention.1} parent=1 // loop_header_branch
      %17 = sbr.rel (%p15) target = $region8
    $region5: #{linear_softmax_attention.1} parent=1 // loop_body
      %s19 = ssub.s32 %s14, 1
      %s20 = ssub.s32 %s14, 2
      %s30 = sadd.s32 1, %s23
      %p31 = scmp.ge.s32.totalorder %s30, 1
      %s32 = scalar_select %p31, 0, %s30
      %s33 = sadd.s32 1, %s22
      %s34 = scalar_select %p31, %s33, %s22
      %p35 = scmp.ge.s32.totalorder %s34, 4
      %s36 = scalar_select %p35, 0, %s34
      %s37 = sadd.s32 1, %s21
      %s38 = scalar_select %p35, %s37, %s21
      %p39 = scmp.ge.s32.totalorder %s38, 2
      %s40 = scalar_select %p39, 0, %s38
      %s41 = ssub.s32 %s21, %s40
      %s42 = ssub.s32 %s22, %s36
      %s43 = sor.u32 %s41, %s42
      %s44 = ssub.s32 %s23, %s32
      %s45 = sor.u32 %s43, %s44
      %p46 = scmp.eq.s32.totalorder %s45, 0
      %s48 = sadd.s32 %s47, 1
      %s49 = scalar_select %p46, %s47, %s48
      %p52 = pneg %p46
      %p53 = scmp.eq.s32.totalorder %s14, 7
      %p54 = por %p52, %p53
      %p55 = scmp.ne.s32.totalorder %s47, %s50
      %p56 = scmp.eq.s32.totalorder %s14, 0
      %p57 = por %p55, %p56
      %p58 = scmp.ne.s32.totalorder %s47, %s50
      %p59 = scmp.eq.s32.totalorder %s19, 7
      %p60 = por %p58, %p59
      %p61 = scmp.ne.s32.totalorder %s50, %s51
      %p62 = scmp.eq.s32.totalorder %s19, 0
      %p63 = por %p61, %p62
      %p64 = scmp.ne.s32.totalorder %s50, %s51
      %p65 = scmp.eq.s32.totalorder %s20, 7
      %p66 = por %p64, %p65
      %p68 = scmp.ne.s32.totalorder %s51, %s67
      %p69 = scmp.eq.s32.totalorder %s20, 0
      %p70 = por %p68, %p69
      %s71 = ssub.s32 %s21, %s40
      %s72 = ssub.s32 %s22, %s36
      %s73 = sor.u32 %s71, %s72
      %p74 = scmp.eq.s32.totalorder %s73, 0
      %s76 = sadd.s32 %s75, 1
      %s77 = scalar_select %p74, %s75, %s76
      %p80 = pneg %p74
      %p81 = scmp.eq.s32.totalorder %s14, 7
      %p82 = por %p80, %p81
      %p83 = scmp.ne.s32.totalorder %s75, %s78
      %p84 = scmp.eq.s32.totalorder %s14, 0
      %p85 = por %p83, %p84
      %p86 = scmp.ne.s32.totalorder %s75, %s78
      %p87 = scmp.eq.s32.totalorder %s19, 7
      %p88 = por %p86, %p87
      %p89 = scmp.ne.s32.totalorder %s78, %s79
      %p90 = scmp.eq.s32.totalorder %s19, 0
      %p91 = por %p89, %p90
      %p92 = scmp.ne.s32.totalorder %s78, %s79
      %p93 = scmp.eq.s32.totalorder %s20, 7
      %p94 = por %p92, %p93
      %p96 = scmp.ne.s32.totalorder %s79, %s95
      %p97 = scmp.eq.s32.totalorder %s20, 0
      %p98 = por %p96, %p97
      %s99 = ssub.s32 %s21, %s40
      %s100 = ssub.s32 %s22, %s36
      %s101 = sor.u32 %s99, %s100
      %p102 = scmp.eq.s32.totalorder %s101, 0
      %s104 = sadd.s32 %s103, 1
      %s105 = scalar_select %p102, %s103, %s104
      %p108 = pneg %p102
      %p109 = scmp.eq.s32.totalorder %s14, 7
      %p110 = por %p108, %p109
      %p111 = scmp.ne.s32.totalorder %s103, %s106
      %p112 = scmp.eq.s32.totalorder %s14, 0
      %p113 = por %p111, %p112
      %p114 = scmp.ne.s32.totalorder %s103, %s106
      %p115 = scmp.eq.s32.totalorder %s19, 7
      %p116 = por %p114, %p115
      %p117 = scmp.ne.s32.totalorder %s106, %s107
      %p118 = scmp.eq.s32.totalorder %s19, 0
      %p119 = por %p117, %p118
      %p120 = scmp.ne.s32.totalorder %s106, %s107
      %p121 = scmp.eq.s32.totalorder %s20, 7
      %p122 = por %p120, %p121
      %p124 = scmp.ne.s32.totalorder %s107, %s123
      %p125 = scmp.eq.s32.totalorder %s20, 0
      %p126 = por %p124, %p125
      %s127 = ssub.s32 %s21, %s40
      %s128 = ssub.s32 %s22, %s36
      %s129 = sor.u32 %s127, %s128
      %s130 = ssub.s32 %s23, %s32
      %s131 = sor.u32 %s129, %s130
      %p132 = scmp.eq.s32.totalorder %s131, 0
      %s134 = sadd.s32 %s133, 1
      %s135 = scalar_select %p132, %s133, %s134
      %p138 = pneg %p132
      %p139 = scmp.eq.s32.totalorder %s14, 7
      %p140 = por %p138, %p139
      %p141 = scmp.ne.s32.totalorder %s133, %s136
      %p142 = scmp.eq.s32.totalorder %s14, 0
      %p143 = por %p141, %p142
      %p144 = scmp.ne.s32.totalorder %s133, %s136
      %p145 = scmp.eq.s32.totalorder %s19, 7
      %p146 = por %p144, %p145
      %p147 = scmp.ne.s32.totalorder %s136, %s137
      %p148 = scmp.eq.s32.totalorder %s19, 0
      %p149 = por %p147, %p148
      %p150 = scmp.ne.s32.totalorder %s136, %s137
      %p151 = scmp.eq.s32.totalorder %s20, 7
      %p152 = por %p150, %p151
      %p154 = scmp.ne.s32.totalorder %s137, %s153
      %p155 = scmp.eq.s32.totalorder %s20, 0
      %p156 = por %p154, %p155
      %s157 = ssub.s32 %s21, %s40
      %s158 = ssub.s32 %s22, %s36
      %s159 = sor.u32 %s157, %s158
      %s160 = ssub.s32 %s23, %s32
      %s161 = sor.u32 %s159, %s160
      %p162 = scmp.eq.s32.totalorder %s161, 0
      %s164 = sadd.s32 %s163, 1
      %s165 = scalar_select %p162, %s163, %s164
      %p168 = pneg %p162
      %p169 = scmp.eq.s32.totalorder %s14, 7
      %p170 = por %p168, %p169
      %p171 = scmp.ne.s32.totalorder %s163, %s166
      %p172 = scmp.eq.s32.totalorder %s14, 0
      %p173 = por %p171, %p172
      %p174 = scmp.ne.s32.totalorder %s163, %s166
      %p175 = scmp.eq.s32.totalorder %s19, 7
      %p176 = por %p174, %p175
      %p177 = scmp.ne.s32.totalorder %s166, %s167
      %p178 = scmp.eq.s32.totalorder %s19, 0
      %p179 = por %p177, %p178
      %p180 = scmp.ne.s32.totalorder %s166, %s167
      %p181 = scmp.eq.s32.totalorder %s20, 7
      %p182 = por %p180, %p181
      %p184 = scmp.ne.s32.totalorder %s167, %s183
      %p185 = scmp.eq.s32.totalorder %s20, 0
      %p186 = por %p184, %p185
      %p187 = scmp.le.s32.totalorder 1, %s14
      %p188 = scmp.lt.s32.totalorder %s14, 9
      %p189 = pnand %p187, %p188
      %p190 = pneg %p189
      // Predicated region
      $region9: #{linear_softmax_attention.1} parent=5 // pred_check
        _
      $region10: #{linear_softmax_attention.1} parent=5 // pred_check_branch
        %192 = sbr.rel (%p189) target = $region12
      $region11: #{linear_softmax_attention.1} parent=5 // pred_region
        %s193 = ssub.s32 %s14, 1
      $region12: #{linear_softmax_attention.1} parent=5 // pred_fallthru
        _
      %p194 = scmp.lt.s32.totalorder %s14, 8
      // Predicated region
      $region13: #{linear_softmax_attention.1} parent=5 // pred_check
        %p195 = pneg %p194
      $region14: #{linear_softmax_attention.1} parent=5 // pred_check_branch
        %197 = sbr.rel (%p195) target = $region16
      $region15: #{linear_softmax_attention.1} parent=5 // pred_region
        // Predicated region
        $region17: #{linear_softmax_attention.1} parent=15 // pred_check
          %p198 = pneg %p57
        $region18: #{linear_softmax_attention.1} parent=15 // pred_check_branch
          %200 = sbr.rel (%p198) target = $region20
        $region19: #{linear_softmax_attention.1} parent=15 // pred_region
          %p201 = scmp.lt.s32.totalorder %s21, 1
          %s202 = scalar_select %p201, %s21, 1
          %p203 = scmp.lt.s32.totalorder %s22, 3
          %s204 = scalar_select %p203, %s22, 3
          %p205 = scmp.lt.s32.totalorder %s23, 0
          %s206 = scalar_select %p205, %s23, 0
          %s207 = sadd.s32 %s206, %s204
          %s208 = smul.addr %s202, 4
          %s209 = sadd.s32 %s207, %s208
          %s210 = smul.addr %s209, 8
          %s211 = scalar_lea.vmem %s0, %s210
        $region20: #{linear_softmax_attention.1} parent=15 // pred_fallthru
          _
        // Predicated region
        $region21: #{linear_softmax_attention.1} parent=15 // pred_check
          %p212 = pneg %p85
        $region22: #{linear_softmax_attention.1} parent=15 // pred_check_branch
          %214 = sbr.rel (%p212) target = $region24
        $region23: #{linear_softmax_attention.1} parent=15 // pred_region
          %p215 = scmp.lt.s32.totalorder %s21, 1
          %s216 = scalar_select %p215, %s21, 1
          %p217 = scmp.lt.s32.totalorder %s22, 3
          %s218 = scalar_select %p217, %s22, 3
          %s219 = smul.addr %s216, 4
          %s220 = sadd.s32 %s218, %s219
          %s221 = smul.addr %s220, 8
          %s222 = scalar_lea.vmem %s1, %s221
        $region24: #{linear_softmax_attention.1} parent=15 // pred_fallthru
          _
        // Predicated region
        $region25: #{linear_softmax_attention.1} parent=15 // pred_check
          %p223 = pneg %p113
        $region26: #{linear_softmax_attention.1} parent=15 // pred_check_branch
          %225 = sbr.rel (%p223) target = $region28
        $region27: #{linear_softmax_attention.1} parent=15 // pred_region
          %p226 = scmp.lt.s32.totalorder %s21, 1
          %s227 = scalar_select %p226, %s21, 1
          %p228 = scmp.lt.s32.totalorder %s22, 3
          %s229 = scalar_select %p228, %s22, 3
          %s230 = smul.addr %s227, 4
          %s231 = sadd.s32 %s229, %s230
          %s232 = smul.addr %s231, 8
          %s233 = scalar_lea.vmem %s2, %s232
        $region28: #{linear_softmax_attention.1} parent=15 // pred_fallthru
          _
      $region16: #{linear_softmax_attention.1} parent=5 // pred_fallthru
        _
      %p234 = scmp.le.s32.totalorder 1, %s14
      %p235 = scmp.lt.s32.totalorder %s14, 9
      %p236 = pnand %p234, %p235
      %p237 = pneg %p236
      // Predicated region
      $region29: #{linear_softmax_attention.1} parent=5 // pred_check
        _
      $region30: #{linear_softmax_attention.1} parent=5 // pred_check_branch
        %239 = sbr.rel (%p236) target = $region32
      $region31: #{linear_softmax_attention.1} parent=5 // pred_region
        %s240 = ssub.s32 %s14, 1
        %p241 = scmp.lt.s32.totalorder %s24, 1
        %s242 = scalar_select %p241, %s24, 1
        %p243 = scmp.lt.s32.totalorder %s25, 3
        %s244 = scalar_select %p243, %s25, 3
        %p245 = scmp.lt.s32.totalorder %s26, 0
        %s246 = scalar_select %p245, %s26, 0
        %s247 = sadd.s32 %s246, %s244
        %s248 = smul.addr %s242, 4
        %s249 = sadd.s32 %s247, %s248
        %s250 = smul.addr %s249, 8
        %s251 = scalar_lea.vmem %s0, %s250
        %p252 = pneg %p63
        %p253 = pneg %p60
        %p254 = scmp.lt.s32.totalorder %s24, 1
        %s255 = scalar_select %p254, %s24, 1
        %p256 = scmp.lt.s32.totalorder %s25, 3
        %s257 = scalar_select %p256, %s25, 3
        %s258 = smul.addr %s255, 4
        %s259 = sadd.s32 %s257, %s258
        %s260 = smul.addr %s259, 8
        %s261 = scalar_lea.vmem %s1, %s260
        %p262 = pneg %p91
        %p263 = pneg %p88
        %p264 = scmp.lt.s32.totalorder %s24, 1
        %s265 = scalar_select %p264, %s24, 1
        %p266 = scmp.lt.s32.totalorder %s25, 3
        %s267 = scalar_select %p266, %s25, 3
        %s268 = smul.addr %s265, 4
        %s269 = sadd.s32 %s267, %s268
        %s270 = smul.addr %s269, 8
        %s271 = scalar_lea.vmem %s2, %s270
        %p272 = pneg %p119
        %p273 = pneg %p116
        %p274 = pneg %p149
        %p275 = pneg %p146
        %p276 = scmp.lt.s32.totalorder %s24, 1
        %s277 = scalar_select %p276, %s24, 1
        %p278 = scmp.lt.s32.totalorder %s25, 3
        %s279 = scalar_select %p278, %s25, 3
        %p280 = scmp.lt.s32.totalorder %s26, 0
        %s281 = scalar_select %p280, %s26, 0
        %s282 = sadd.s32 %s281, %s279
        %s283 = smul.addr %s277, 4
        %s284 = sadd.s32 %s282, %s283
        %s285 = smul.addr %s284, 8
        %s286 = scalar_lea.vmem %s3, %s285
        %p287 = pneg %p179
        %p288 = pneg %p176
        %s289 = sand.u32 %s166, 1
        %s290 = scalar_lea.sflag [#allocation3], %s289
        %s291 = sand.u32 %s166, 1
        %s292 = smul.addr %s291, 8
        %s293 = scalar_lea.vmem [#allocation2], %s292
        %p294 = scmp.lt.s32.totalorder %s24, 1
        %s295 = scalar_select %p294, %s24, 1
        %p296 = scmp.lt.s32.totalorder %s25, 3
        %s297 = scalar_select %p296, %s25, 3
        %p298 = scmp.lt.s32.totalorder %s26, 0
        %s299 = scalar_select %p298, %s26, 0
        %s300 = sadd.s32 %s299, %s297
        %s301 = smul.addr %s295, 4
        %s302 = sadd.s32 %s300, %s301
        %s303 = smul.addr %s302, 8
        %s304 = scalar_lea.vmem %s0, %s303
        %p305 = scmp.lt.s32.totalorder %s24, 1
        %s306 = scalar_select %p305, %s24, 1
        %p307 = scmp.lt.s32.totalorder %s25, 3
        %s308 = scalar_select %p307, %s25, 3
        %s309 = smul.addr %s306, 4
        %s310 = sadd.s32 %s308, %s309
        %s311 = smul.addr %s310, 8
        %s312 = scalar_lea.vmem %s1, %s311
        %p313 = scmp.lt.s32.totalorder %s24, 1
        %s314 = scalar_select %p313, %s24, 1
        %p315 = scmp.lt.s32.totalorder %s25, 3
        %s316 = scalar_select %p315, %s25, 3
        %s317 = smul.addr %s314, 4
        %s318 = sadd.s32 %s316, %s317
        %s319 = smul.addr %s318, 8
        %s320 = scalar_lea.vmem %s2, %s319
        %p321 = scmp.lt.s32.totalorder %s24, 1
        %s322 = scalar_select %p321, %s24, 1
        %p323 = scmp.lt.s32.totalorder %s25, 3
        %s324 = scalar_select %p323, %s25, 3
        %p325 = scmp.lt.s32.totalorder %s26, 0
        %s326 = scalar_select %p325, %s26, 0
        %s327 = sadd.s32 %s326, %s324
        %s328 = smul.addr %s322, 4
        %s329 = sadd.s32 %s327, %s328
        %s330 = smul.addr %s329, 8
        %s331 = scalar_lea.vmem %s3, %s330
        %v332 = vld [vmem:[%s304] sm:$0xff]
        %v333 = vld [vmem:[%s312] sm:$0xff]
        %v334 = vld [vmem:[%s320] sm:$0xff]
        %vm335 = vcmask 261120
        %v337 = vsel %vm335, %v332, 0
        %v340 = vsel %vm335, %v333, 0
        %342 = vmatprep.subr.mxu0 0.0
        %343 = vmatpush1.xpose.msra.mxu0 %v340
        %344 = vmatprep.subr.mxu0 0.0
        %345 = vmatpush1.xpose.msra.mxu0 0.0
        %346 = vmatprep.subr.mxu0 0.0
        %347 = vmatpush1.xpose.msra.mxu0 0.0
        %348 = vmatprep.subr.mxu0 0.0
        %349 = vmatpush1.xpose.msra.mxu0 0.0
        %350 = vmatprep.subr.mxu0 0.0
        %351 = vmatpush1.xpose.msra.mxu0 0.0
        %352 = vmatprep.subr.mxu0 0.0
        %353 = vmatpush1.xpose.msra.mxu0 0.0
        %354 = vmatprep.subr.mxu0 0.0
        %355 = vmatpush1.xpose.msra.mxu0 0.0
        %356 = vmatprep.subr.mxu0 0.0
        %357 = vmatpush1.xpose.msra.mxu0 0.0
        %358 = vmatprep.subr.mxu0 0.0
        %359 = vmatpush1.xpose.msra.mxu0 0.0
        %360 = vmatprep.subr.mxu0 0.0
        %361 = vmatpush1.xpose.msra.mxu0 0.0
        %362 = vmatprep.subr.mxu0 0.0
        %363 = vmatpush1.xpose.msra.mxu0 0.0
        %364 = vmatprep.subr.mxu0 0.0
        %365 = vmatpush1.xpose.msra.mxu0 0.0
        %366 = vmatprep.subr.mxu0 0.0
        %367 = vmatpush1.xpose.msra.mxu0 0.0
        %368 = vmatprep.subr.mxu0 0.0
        %369 = vmatpush1.xpose.msra.mxu0 0.0
        %370 = vmatprep.subr.mxu0 0.0
        %371 = vmatpush1.xpose.msra.mxu0 0.0
        %372 = vmatprep.subr.mxu0 0.0
        %373 = vmatpush1.xpose.msra.mxu0 0.0
        %374 = vmatprep.subr.mxu0 0.0
        %375 = vmatpush1.xpose.msra.mxu0 0.0
        %376 = vmatprep.subr.mxu0 0.0
        %377 = vmatpush1.xpose.msra.mxu0 0.0
        %378 = vmatprep.subr.mxu0 0.0
        %379 = vmatpush1.xpose.msra.mxu0 0.0
        %380 = vmatprep.subr.mxu0 0.0
        %381 = vmatpush1.xpose.msra.mxu0 0.0
        %382 = vmatprep.subr.mxu0 0.0
        %383 = vmatpush1.xpose.msra.mxu0 0.0
        %384 = vmatprep.subr.mxu0 0.0
        %385 = vmatpush1.xpose.msra.mxu0 0.0
        %386 = vmatprep.subr.mxu0 0.0
        %387 = vmatpush1.xpose.msra.mxu0 0.0
        %388 = vmatprep.subr.mxu0 0.0
        %389 = vmatpush1.xpose.msra.mxu0 0.0
        %390 = vmatprep.subr.mxu0 0.0
        %391 = vmatpush1.xpose.msra.mxu0 0.0
        %392 = vmatprep.subr.mxu0 0.0
        %393 = vmatpush1.xpose.msra.mxu0 0.0
        %394 = vmatprep.subr.mxu0 0.0
        %395 = vmatpush1.xpose.msra.mxu0 0.0
        %396 = vmatprep.subr.mxu0 0.0
        %397 = vmatpush1.xpose.msra.mxu0 0.0
        %398 = vmatprep.subr.mxu0 0.0
        %399 = vmatpush1.xpose.msra.mxu0 0.0
        %400 = vmatprep.subr.mxu0 0.0
        %401 = vmatpush1.xpose.msra.mxu0 0.0
        %402 = vmatprep.subr.mxu0 0.0
        %403 = vmatpush1.xpose.msra.mxu0 0.0
        %404 = vmatprep.subr.mxu0 0.0
        %405 = vmatpush1.xpose.msra.mxu0 0.0
        %406 = vmatprep.mubr.f32.mxu0 0.0
        %407 = vmatmul.mubr.f32.gmra.mrb[0].mxu0 %v337
        %v408 = vpop.f32.mrb[0].mxu0
        %v409 = vadd.f32 0.0, %v408
        %v410 = vpop.f32.mrb[0].mxu0
        %411 = vdwg.mxu0
        %vm412 = vcmask 64512
        %v413 = vsel %vm412, %v409, -inf
        %414 = vmax.xlane.f32.xlu0 %v413
        %v415 = vpop.xlane.xlu0 %414
        %v416 = vsub.f32 %v409, %v415
        %v417 = vmul.f32 %v416, 1.442695
        %v418 = vpow.pop %v417
        %v419 = vsel %vm412, %v418, 0.0
        %420 = vadd.xlane.f32.xlu0 %v419
        %v421 = vpop.xlane.xlu0 %420
        %v422 = vrcp.pop %v421
        %v423 = vmul.f32 1.0, %v422
        %v424 = vmul.f32 %v418, %v423
        %425 = vst.msk [vmem:[%s293] sm:$0xff] %vm412, %v424
        %v427 = vsel %vm412, %v424, 0
        %429 = vmatprep.subr.mxu0 0.0
        %430 = vmatpush1.msra.mxu0 %v334
        %431 = vmatprep.subr.mxu0 0.0
        %432 = vmatpush1.msra.mxu0 0.0
        %433 = vmatprep.subr.mxu0 0.0
        %434 = vmatpush1.msra.mxu0 0.0
        %435 = vmatprep.subr.mxu0 0.0
        %436 = vmatpush1.msra.mxu0 0.0
        %437 = vmatprep.subr.mxu0 0.0
        %438 = vmatpush1.msra.mxu0 0.0
        %439 = vmatprep.subr.mxu0 0.0
        %440 = vmatpush1.msra.mxu0 0.0
        %441 = vmatprep.subr.mxu0 0.0
        %442 = vmatpush1.msra.mxu0 0.0
        %443 = vmatprep.subr.mxu0 0.0
        %444 = vmatpush1.msra.mxu0 0.0
        %445 = vmatprep.subr.mxu0 0.0
        %446 = vmatpush1.msra.mxu0 0.0
        %447 = vmatprep.subr.mxu0 0.0
        %448 = vmatpush1.msra.mxu0 0.0
        %449 = vmatprep.subr.mxu0 0.0
        %450 = vmatpush1.msra.mxu0 0.0
        %451 = vmatprep.subr.mxu0 0.0
        %452 = vmatpush1.msra.mxu0 0.0
        %453 = vmatprep.subr.mxu0 0.0
        %454 = vmatpush1.msra.mxu0 0.0
        %455 = vmatprep.subr.mxu0 0.0
        %456 = vmatpush1.msra.mxu0 0.0
        %457 = vmatprep.subr.mxu0 0.0
        %458 = vmatpush1.msra.mxu0 0.0
        %459 = vmatprep.subr.mxu0 0.0
        %460 = vmatpush1.msra.mxu0 0.0
        %461 = vmatprep.subr.mxu0 0.0
        %462 = vmatpush1.msra.mxu0 0.0
        %463 = vmatprep.subr.mxu0 0.0
        %464 = vmatpush1.msra.mxu0 0.0
        %465 = vmatprep.subr.mxu0 0.0
        %466 = vmatpush1.msra.mxu0 0.0
        %467 = vmatprep.subr.mxu0 0.0
        %468 = vmatpush1.msra.mxu0 0.0
        %469 = vmatprep.subr.mxu0 0.0
        %470 = vmatpush1.msra.mxu0 0.0
        %471 = vmatprep.subr.mxu0 0.0
        %472 = vmatpush1.msra.mxu0 0.0
        %473 = vmatprep.subr.mxu0 0.0
        %474 = vmatpush1.msra.mxu0 0.0
        %475 = vmatprep.subr.mxu0 0.0
        %476 = vmatpush1.msra.mxu0 0.0
        %477 = vmatprep.subr.mxu0 0.0
        %478 = vmatpush1.msra.mxu0 0.0
        %479 = vmatprep.subr.mxu0 0.0
        %480 = vmatpush1.msra.mxu0 0.0
        %481 = vmatprep.subr.mxu0 0.0
        %482 = vmatpush1.msra.mxu0 0.0
        %483 = vmatprep.subr.mxu0 0.0
        %484 = vmatpush1.msra.mxu0 0.0
        %485 = vmatprep.subr.mxu0 0.0
        %486 = vmatpush1.msra.mxu0 0.0
        %487 = vmatprep.subr.mxu0 0.0
        %488 = vmatpush1.msra.mxu0 0.0
        %489 = vmatprep.subr.mxu0 0.0
        %490 = vmatpush1.msra.mxu0 0.0
        %491 = vmatprep.subr.mxu0 0.0
        %492 = vmatpush1.msra.mxu0 0.0
        %493 = vmatprep.mubr.f32.mxu0 0.0
        %494 = vmatmul.mubr.f32.gmra.mrb[0].mxu0 %v427
        %v495 = vpop.f32.mrb[0].mxu0
        %v496 = vadd.f32 0.0, %v495
        %v497 = vpop.f32.mrb[0].mxu0
        %498 = vdwg.mxu0
        %499 = vst.msk [vmem:[%s331] sm:$0xff] %vm335, %v496
        %p500 = scmp.lt.s32.totalorder %s24, 1
        %s501 = scalar_select %p500, %s24, 1
        %p502 = scmp.lt.s32.totalorder %s25, 3
        %s503 = scalar_select %p502, %s25, 3
        %p504 = scmp.lt.s32.totalorder %s26, 0
        %s505 = scalar_select %p504, %s26, 0
        %s506 = sadd.s32 %s505, %s503
        %s507 = smul.addr %s501, 4
        %s508 = sadd.s32 %s506, %s507
        %s509 = smul.addr %s508, 8
        %s510 = scalar_lea.vmem %s3, %s509
        %s511 = sand.u32 %s166, 1
        %s512 = scalar_lea.sflag [#allocation3], %s511
        %s513 = sand.u32 %s166, 1
        %s514 = smul.addr %s513, 8
        %s515 = scalar_lea.vmem [#allocation2], %s514
        // Predicated region
        $region33: #{linear_softmax_attention.1} parent=31 // pred_check
          %p516 = pneg %p146
        $region34: #{linear_softmax_attention.1} parent=31 // pred_check_branch
          %518 = sbr.rel (%p516) target = $region36
        $region35: #{linear_softmax_attention.1} parent=31 // pred_region
          _
        $region36: #{linear_softmax_attention.1} parent=31 // pred_fallthru
          _
        // Predicated region
        $region37: #{linear_softmax_attention.1} parent=31 // pred_check
          %p519 = pneg %p176
        $region38: #{linear_softmax_attention.1} parent=31 // pred_check_branch
          %521 = sbr.rel (%p519) target = $region40
        $region39: #{linear_softmax_attention.1} parent=31 // pred_region
          %s523 = ssub.s32 128, 128
          %524 = vsyncadd %s512, %s523
          %s525 = sadd.s32 %s26, %s25
          %s526 = smul.addr %s24, 4
          %s527 = sadd.s32 %s525, %s526
          %s528 = smul.addr %s527, 128
          %s529 = scalar_lea.hbm %s4, %s528
          %s531 = sshll.u32 %s515, 4
          %s532 = int_to_ptr.vmem [resolvable:$true] %s531
          %534 = dma.vmem_to_hbm [thread:$0]  %s532, 128, %s529, %s512
        $region40: #{linear_softmax_attention.1} parent=31 // pred_fallthru
          _
      $region32: #{linear_softmax_attention.1} parent=5 // pred_fallthru
        _
      %p535 = scmp.le.s32.totalorder 2, %s14
      // Predicated region
      $region41: #{linear_softmax_attention.1} parent=5 // pred_check
        %p536 = pneg %p535
      $region42: #{linear_softmax_attention.1} parent=5 // pred_check_branch
        %538 = sbr.rel (%p536) target = $region44
      $region43: #{linear_softmax_attention.1} parent=5 // pred_region
        %s539 = ssub.s32 %s14, 2
        // Predicated region
        $region45: #{linear_softmax_attention.1} parent=43 // pred_check
          %p540 = pneg %p152
        $region46: #{linear_softmax_attention.1} parent=43 // pred_check_branch
          %542 = sbr.rel (%p540) target = $region48
        $region47: #{linear_softmax_attention.1} parent=43 // pred_region
          %p543 = scmp.lt.s32.totalorder %s27, 1
          %s544 = scalar_select %p543, %s27, 1
          %p545 = scmp.lt.s32.totalorder %s28, 3
          %s546 = scalar_select %p545, %s28, 3
          %p547 = scmp.lt.s32.totalorder %s29, 0
          %s548 = scalar_select %p547, %s29, 0
          %s549 = sadd.s32 %s548, %s546
          %s550 = smul.addr %s544, 4
          %s551 = sadd.s32 %s549, %s550
          %s552 = smul.addr %s551, 8
          %s553 = scalar_lea.vmem %s3, %s552
        $region48: #{linear_softmax_attention.1} parent=43 // pred_fallthru
          _
        // Predicated region
        $region49: #{linear_softmax_attention.1} parent=43 // pred_check
          %p554 = pneg %p182
        $region50: #{linear_softmax_attention.1} parent=43 // pred_check_branch
          %556 = sbr.rel (%p554) target = $region52
        $region51: #{linear_softmax_attention.1} parent=43 // pred_region
          %s557 = sand.u32 %s167, 1
          %s558 = scalar_lea.sflag [#allocation3], %s557
          %s559 = sand.u32 %s167, 1
          %s560 = smul.addr %s559, 8
          %s561 = scalar_lea.vmem [#allocation2], %s560
          %562 = dma.done %s558, 128
        $region52: #{linear_softmax_attention.1} parent=43 // pred_fallthru
          _
      $region44: #{linear_softmax_attention.1} parent=5 // pred_fallthru
        _
    $region6: #{linear_softmax_attention.1} parent=1 // loop_footer
      %s18 = sadd.s32 1, %s14
    $region7: #{linear_softmax_attention.1} parent=1 // loop_footer_branch
      %13 = sbr.rel target = $region3
    $region8: #{linear_softmax_attention.1} parent=1 // loop_exit
      _
    %563 = vsyncpa [#allocation3], 1
    %s564 = scalar_lea.sflag [#allocation3], 1
    %565 = vsyncpa %s564, 1

</llo_original>
